<compile_context>
chip_gen: v6e
topology: v6e:2x2x1
jax: 0.10.0
libtpu: 0.0.40
codegen_flags: <defaults>
</compile_context>

<pallas_src>
import jax
import jax.numpy as jnp
from jax.experimental import pallas as pl
from jax.experimental.pallas import tpu as pltpu

_LANE = 128


def _round_up(x: int, m: int) -> int:
    return (x + m - 1) // m * m


def _pad2(x, rows: int, cols: int):
    return jnp.pad(x, ((0, rows - x.shape[0]), (0, cols - x.shape[1])))


def _pad1(x, n: int):
    return jnp.pad(x, (0, n - x.shape[0]))


def _make_mlp_kernel(num_hidden_layers: int):
    """Fused MLP: num_hidden_layers x (Linear + ReLU) followed by a Linear.

    Operands (activations/weights) are bf16 -> MXU fast path; accumulation,
    bias add and ReLU are f32.
    """

    def kernel(*refs):
        z_ref = refs[0]
        o_ref = refs[-1]
        wb = refs[1:-1]  # interleaved (W bf16, b f32); last pair = output layer

        z = z_ref[...]                                     # (TILE_B, in_pad) bf16
        for l in range(num_hidden_layers):
            w = wb[2 * l][...]                             # (d_in_pad, hid_pad) bf16
            b = wb[2 * l + 1][...]                         # (1, hid_pad) f32
            acc = jnp.dot(z, w, preferred_element_type=jnp.float32) + b
            z = jnp.maximum(acc, 0.0).astype(jnp.bfloat16)
        w_o = wb[2 * num_hidden_layers][...]               # (hid_pad, out_pad) bf16
        b_o = wb[2 * num_hidden_layers + 1][...]           # (1, out_pad) f32
        out = jnp.dot(z, w_o, preferred_element_type=jnp.float32) + b_o
        o_ref[...] = out.astype(o_ref.dtype)               # full-lane store

    return kernel


def init_params(key, input_dim, hidden_dim, out_dim, num_layers):
    keys = jax.random.split(key, 2 * (num_layers + 1))
    layers = []
    d_in = input_dim
    for l in range(num_layers):
        w = jax.random.normal(keys[2 * l], (d_in, hidden_dim), jnp.float32) * 0.1
        b = jax.random.normal(keys[2 * l + 1], (hidden_dim,), jnp.float32) * 0.1
        layers.append((w, b))
        d_in = hidden_dim
    w_out = jax.random.normal(keys[-2], (hidden_dim, out_dim), jnp.float32) * 0.1
    b_out = jax.random.normal(keys[-1], (out_dim,), jnp.float32) * 0.1
    return {"layers": layers, "out": (w_out, b_out)}


def _build_input(batch, opts):
    """Mirrors the concat / normalization logic of the PyTorch forward."""
    seg_input_dim = opts.get("spatial_embedding_dim", 8)
    use_viewer_pos = opts.get("seg_use_viewer_pos", False)
    use_direction = opts.get("seg_use_direction", False)
    c_sl = opts.get("context_side_length", 32)

    s_embeds = batch["s_embeds"]
    if s_embeds.shape[1] != seg_input_dim:
        raise Exception(
            "The seg spatial embed is wrong size: {}".format(s_embeds.shape))

    inp = [s_embeds]
    normalizing_const = c_sl * 1.0 / 2.0
    if use_viewer_pos:
        inp.append(batch["viewer_pos"].astype(jnp.float32) / normalizing_const)
    if use_direction:
        inp.append(batch["dir_vec"].astype(jnp.float32))
    return jnp.concatenate(inp, axis=1)  # == torch.cat(inp, 1)


def segment_direction_embedding_forward(params, batch, opts, *, tile_b=2048):
    """Pallas equivalent of SegmentDirectionEmbeddingNet.forward(b)."""
    z = _build_input(batch, opts)               # (B, in_dim) f32
    B, in_dim = z.shape

    layers = params["layers"]
    w_out, b_out = params["out"]
    num_hidden = len(layers)
    hidden_dim = w_out.shape[0]
    out_dim = w_out.shape[1]

    # Lane-dense feature dims (multiples of 128).
    in_pad = _round_up(in_dim, _LANE)
    hid_pad = _round_up(hidden_dim, _LANE)
    out_pad = _round_up(out_dim, _LANE)

    # --- batch tiling: 128-row multiples, big tiles, but keep grid >= 2 when
    # the padded batch allows it (so v7x's two TensorCores both get work).
    tile_b = max(_LANE, (tile_b // _LANE) * _LANE)
    b128 = _round_up(B, _LANE)
    if b128 >= 2 * _LANE:
        tile_b_eff = min(tile_b, _round_up(b128 // 2, _LANE))
    else:
        tile_b_eff = _LANE
    b_pad = _round_up(B, tile_b_eff)
    grid = (b_pad // tile_b_eff,)

    # Zero-pad batch + feature dims, cast activations to bf16 once.
    z = jnp.pad(z, ((0, b_pad - B), (0, in_pad - in_dim))).astype(jnp.bfloat16)

    # Zero-pad + cast weights (bf16) and biases (f32) once; padded rows/cols are
    # zero so padded activation columns stay exactly zero through every layer.
    flat_wb = []
    d_in_pad = in_pad
    for (w, b) in layers:
        flat_wb.append(_pad2(w, d_in_pad, hid_pad).astype(jnp.bfloat16))
        flat_wb.append(_pad1(b, hid_pad).reshape(1, -1).astype(jnp.float32))
        d_in_pad = hid_pad
    flat_wb.append(_pad2(w_out, hid_pad, out_pad).astype(jnp.bfloat16))
    flat_wb.append(_pad1(b_out, out_pad).reshape(1, -1).astype(jnp.float32))

    # Weights/biases are tiny: full blocks with a constant index_map -> resident.
    weight_specs = [pl.BlockSpec(a.shape, lambda i: (0, 0)) for a in flat_wb]

    flops = 2 * b_pad * (in_pad * hid_pad
                         + max(num_hidden - 1, 0) * hid_pad * hid_pad
                         + hid_pad * out_pad)
    bytes_accessed = (int(z.size) * 2 + b_pad * out_pad * 4
                      + sum(int(a.size) * a.dtype.itemsize for a in flat_wb))

    out = pl.pallas_call(
        _make_mlp_kernel(num_hidden),
        out_shape=jax.ShapeDtypeStruct((b_pad, out_pad), jnp.float32),
        grid_spec=pltpu.PrefetchScalarGridSpec(
            num_scalar_prefetch=0,
            grid=grid,
            in_specs=[pl.BlockSpec((tile_b_eff, in_pad), lambda i: (i, 0))]
                     + weight_specs,
            out_specs=pl.BlockSpec((tile_b_eff, out_pad), lambda i: (i, 0)),
        ),
        compiler_params=pltpu.CompilerParams(
            dimension_semantics=("parallel",),
            vmem_limit_bytes=32 * 1024 * 1024),
        cost_estimate=pl.CostEstimate(
            flops=flops, transcendentals=0, bytes_accessed=bytes_accessed),
    )(z, *flat_wb)

    # Slice off batch + lane padding, then .unsqueeze(2).unsqueeze(3).unsqueeze(4)
    return out[:B, :out_dim].reshape(B, out_dim, 1, 1, 1)


def segment_direction_embedding_ref(params, batch, opts):
    """Plain-JAX f32 reference mirroring the PyTorch forward."""
    z = _build_input(batch, opts)
    for (w, b) in params["layers"]:
        z = jnp.maximum(jnp.dot(z, w) + b, 0.0)
    w_out, b_out = params["out"]
    out = jnp.dot(z, w_out) + b_out
    return out.reshape(out.shape[0], out.shape[1], 1, 1, 1)


def _run_case(key, params, opts, B):
    k_s, k_v, k_d = jax.random.split(key, 3)
    batch = {
        "s_embeds": jax.random.normal(
            k_s, (B, opts["spatial_embedding_dim"]), jnp.float32),
        "viewer_pos": jax.random.normal(k_v, (B, 3), jnp.float32)
                      * opts["context_side_length"],
        "dir_vec": jax.random.normal(k_d, (B, 5), jnp.float32),
    }
    out = segment_direction_embedding_forward(params, batch, opts)
    out = jax.block_until_ready(out)
    ref = segment_direction_embedding_ref(params, batch, opts)
    assert out.shape == (B, opts["output_embedding_dim"], 1, 1, 1), out.shape
    # bf16 MXU operands with f32 accumulation -> few-1e-3 level error budget.
    assert jnp.allclose(out, ref, atol=5e-2, rtol=5e-2), (out, ref)


if __name__ == "__main__":
    key = jax.random.PRNGKey(0)

    opts = {
        "output_embedding_dim": 8,
        "seg_use_viewer_pos": True,
        "seg_use_direction": True,
        "hidden_dim": 64,
        "num_seg_dir_layers": 3,
        "spatial_embedding_dim": 8,
        "context_side_length": 32,
    }
    input_dim = opts["spatial_embedding_dim"] + 3 + 5  # s_embeds + viewer_pos + dir_vec

    k_params, k_small, k_big = jax.random.split(key, 3)
    params = init_params(
        k_params, input_dim, opts["hidden_dim"],
        opts["output_embedding_dim"], opts["num_seg_dir_layers"])

    # Small batch (single grid step) and a batch that exercises multi-step grid
    # + batch/lane padding & slicing.
    _run_case(k_small, params, opts, B=8)
    _run_case(k_big, params, opts, B=300)

    print("KERNEL_OK")
</pallas_src>

<mosaic_0001>
module attributes {stable_mosaic.version = 11 : i64} {
  func.func @kernel(%arg0: i32, %arg1: memref<128x128xbf16, #tpu.memory_space<vmem>>, %arg2: memref<128x128xbf16, #tpu.memory_space<vmem>>, %arg3: memref<1x128xf32, #tpu.memory_space<vmem>>, %arg4: memref<128x128xbf16, #tpu.memory_space<vmem>>, %arg5: memref<1x128xf32, #tpu.memory_space<vmem>>, %arg6: memref<128x128xbf16, #tpu.memory_space<vmem>>, %arg7: memref<1x128xf32, #tpu.memory_space<vmem>>, %arg8: memref<128x128xbf16, #tpu.memory_space<vmem>>, %arg9: memref<1x128xf32, #tpu.memory_space<vmem>>, %arg10: memref<128x128xf32, #tpu.memory_space<vmem>>) attributes {dimension_semantics = [#tpu.dimension_semantics<parallel>], iteration_bounds = array<i64: 1>, scalar_prefetch = 0 : i64, scratch_operands = 0 : i64, tpu.core_type = #tpu.core_type<tc>, window_params = [{transform_indices = @transform_0, window_bounds = array<i64: 128, 128>}, {pipeline_mode = #tpu.pipeline_mode<synchronous>, transform_indices = @transform_1, window_bounds = array<i64: 128, 128>}, {pipeline_mode = #tpu.pipeline_mode<synchronous>, transform_indices = @transform_2, window_bounds = array<i64: 1, 128>}, {pipeline_mode = #tpu.pipeline_mode<synchronous>, transform_indices = @transform_3, window_bounds = array<i64: 128, 128>}, {pipeline_mode = #tpu.pipeline_mode<synchronous>, transform_indices = @transform_4, window_bounds = array<i64: 1, 128>}, {pipeline_mode = #tpu.pipeline_mode<synchronous>, transform_indices = @transform_5, window_bounds = array<i64: 128, 128>}, {pipeline_mode = #tpu.pipeline_mode<synchronous>, transform_indices = @transform_6, window_bounds = array<i64: 1, 128>}, {pipeline_mode = #tpu.pipeline_mode<synchronous>, transform_indices = @transform_7, window_bounds = array<i64: 128, 128>}, {pipeline_mode = #tpu.pipeline_mode<synchronous>, transform_indices = @transform_8, window_bounds = array<i64: 1, 128>}, {transform_indices = @transform_9, window_bounds = array<i64: 128, 128>}]} {
    %c0 = arith.constant 0 : index
    %c0_0 = arith.constant 0 : index
    %0 = vector.load %arg1[%c0, %c0_0] : memref<128x128xbf16, #tpu.memory_space<vmem>>, vector<128x128xbf16>
    %c0_1 = arith.constant 0 : index
    %c0_2 = arith.constant 0 : index
    %1 = vector.load %arg2[%c0_1, %c0_2] : memref<128x128xbf16, #tpu.memory_space<vmem>>, vector<128x128xbf16>
    %c0_3 = arith.constant 0 : index
    %c0_4 = arith.constant 0 : index
    %2 = vector.load %arg3[%c0_3, %c0_4] : memref<1x128xf32, #tpu.memory_space<vmem>>, vector<1x128xf32>
    %cst = arith.constant dense<0.000000e+00> : vector<128x128xf32>
    %3 = tpu.matmul %0, %1, %cst {dimension_numbers = #tpu.dot_dimension_numbers<[1], [0], [0], [1], [0, 0, 1, 1], [], []>} : vector<128x128xbf16>, vector<128x128xbf16>, vector<128x128xf32> -> vector<128x128xf32>
    %4 = vector.broadcast %2 : vector<1x128xf32> to vector<128x128xf32>
    %5 = arith.addf %3, %4 : vector<128x128xf32>
    %cst_5 = arith.constant 0.000000e+00 : f32
    %6 = vector.broadcast %cst_5 : f32 to vector<128x128xf32>
    %7 = arith.maximumf %5, %6 : vector<128x128xf32>
    %8 = arith.truncf %7 : vector<128x128xf32> to vector<128x128xbf16>
    %c0_6 = arith.constant 0 : index
    %c0_7 = arith.constant 0 : index
    %9 = vector.load %arg4[%c0_6, %c0_7] : memref<128x128xbf16, #tpu.memory_space<vmem>>, vector<128x128xbf16>
    %c0_8 = arith.constant 0 : index
    %c0_9 = arith.constant 0 : index
    %10 = vector.load %arg5[%c0_8, %c0_9] : memref<1x128xf32, #tpu.memory_space<vmem>>, vector<1x128xf32>
    %cst_10 = arith.constant dense<0.000000e+00> : vector<128x128xf32>
    %11 = tpu.matmul %8, %9, %cst_10 {dimension_numbers = #tpu.dot_dimension_numbers<[1], [0], [0], [1], [0, 0, 1, 1], [], []>} : vector<128x128xbf16>, vector<128x128xbf16>, vector<128x128xf32> -> vector<128x128xf32>
    %12 = vector.broadcast %10 : vector<1x128xf32> to vector<128x128xf32>
    %13 = arith.addf %11, %12 : vector<128x128xf32>
    %cst_11 = arith.constant 0.000000e+00 : f32
    %14 = vector.broadcast %cst_11 : f32 to vector<128x128xf32>
    %15 = arith.maximumf %13, %14 : vector<128x128xf32>
    %16 = arith.truncf %15 : vector<128x128xf32> to vector<128x128xbf16>
    %c0_12 = arith.constant 0 : index
    %c0_13 = arith.constant 0 : index
    %17 = vector.load %arg6[%c0_12, %c0_13] : memref<128x128xbf16, #tpu.memory_space<vmem>>, vector<128x128xbf16>
    %c0_14 = arith.constant 0 : index
    %c0_15 = arith.constant 0 : index
    %18 = vector.load %arg7[%c0_14, %c0_15] : memref<1x128xf32, #tpu.memory_space<vmem>>, vector<1x128xf32>
    %cst_16 = arith.constant dense<0.000000e+00> : vector<128x128xf32>
    %19 = tpu.matmul %16, %17, %cst_16 {dimension_numbers = #tpu.dot_dimension_numbers<[1], [0], [0], [1], [0, 0, 1, 1], [], []>} : vector<128x128xbf16>, vector<128x128xbf16>, vector<128x128xf32> -> vector<128x128xf32>
    %20 = vector.broadcast %18 : vector<1x128xf32> to vector<128x128xf32>
    %21 = arith.addf %19, %20 : vector<128x128xf32>
    %cst_17 = arith.constant 0.000000e+00 : f32
    %22 = vector.broadcast %cst_17 : f32 to vector<128x128xf32>
    %23 = arith.maximumf %21, %22 : vector<128x128xf32>
    %24 = arith.truncf %23 : vector<128x128xf32> to vector<128x128xbf16>
    %c0_18 = arith.constant 0 : index
    %c0_19 = arith.constant 0 : index
    %25 = vector.load %arg8[%c0_18, %c0_19] : memref<128x128xbf16, #tpu.memory_space<vmem>>, vector<128x128xbf16>
    %c0_20 = arith.constant 0 : index
    %c0_21 = arith.constant 0 : index
    %26 = vector.load %arg9[%c0_20, %c0_21] : memref<1x128xf32, #tpu.memory_space<vmem>>, vector<1x128xf32>
    %cst_22 = arith.constant dense<0.000000e+00> : vector<128x128xf32>
    %27 = tpu.matmul %24, %25, %cst_22 {dimension_numbers = #tpu.dot_dimension_numbers<[1], [0], [0], [1], [0, 0, 1, 1], [], []>} : vector<128x128xbf16>, vector<128x128xbf16>, vector<128x128xf32> -> vector<128x128xf32>
    %28 = vector.broadcast %26 : vector<1x128xf32> to vector<128x128xf32>
    %29 = arith.addf %27, %28 : vector<128x128xf32>
    %c0_23 = arith.constant 0 : index
    %c0_24 = arith.constant 0 : index
    %30 = vector.load %arg10[%c0_23, %c0_24] : memref<128x128xf32, #tpu.memory_space<vmem>>, vector<128x128xf32>
    tpu.vector_store %arg10[%c0_23, %c0_24], %29 {strides = array<i32>} : memref<128x128xf32, #tpu.memory_space<vmem>>, vector<128x128xf32>,
    return
  }
  func.func @transform_0(%arg0: i32) -> (i32, i32) {
    %c0_i32 = arith.constant 0 : i32
    %c0_i32_0 = arith.constant 0 : i32
    return %arg0, %c0_i32 : i32, i32
  }
  func.func @transform_1(%arg0: i32) -> (i32, i32) {
    %c0_i32 = arith.constant 0 : i32
    %c0_i32_0 = arith.constant 0 : i32
    %c0_i32_1 = arith.constant 0 : i32
    return %c0_i32, %c0_i32_0 : i32, i32
  }
  func.func @transform_2(%arg0: i32) -> (i32, i32) {
    %c0_i32 = arith.constant 0 : i32
    %c0_i32_0 = arith.constant 0 : i32
    %c0_i32_1 = arith.constant 0 : i32
    return %c0_i32, %c0_i32_0 : i32, i32
  }
  func.func @transform_3(%arg0: i32) -> (i32, i32) {
    %c0_i32 = arith.constant 0 : i32
    %c0_i32_0 = arith.constant 0 : i32
    %c0_i32_1 = arith.constant 0 : i32
    return %c0_i32, %c0_i32_0 : i32, i32
  }
  func.func @transform_4(%arg0: i32) -> (i32, i32) {
    %c0_i32 = arith.constant 0 : i32
    %c0_i32_0 = arith.constant 0 : i32
    %c0_i32_1 = arith.constant 0 : i32
    return %c0_i32, %c0_i32_0 : i32, i32
  }
  func.func @transform_5(%arg0: i32) -> (i32, i32) {
    %c0_i32 = arith.constant 0 : i32
    %c0_i32_0 = arith.constant 0 : i32
    %c0_i32_1 = arith.constant 0 : i32
    return %c0_i32, %c0_i32_0 : i32, i32
  }
  func.func @transform_6(%arg0: i32) -> (i32, i32) {
    %c0_i32 = arith.constant 0 : i32
    %c0_i32_0 = arith.constant 0 : i32
    %c0_i32_1 = arith.constant 0 : i32
    return %c0_i32, %c0_i32_0 : i32, i32
  }
  func.func @transform_7(%arg0: i32) -> (i32, i32) {
    %c0_i32 = arith.constant 0 : i32
    %c0_i32_0 = arith.constant 0 : i32
    %c0_i32_1 = arith.constant 0 : i32
    return %c0_i32, %c0_i32_0 : i32, i32
  }
  func.func @transform_8(%arg0: i32) -> (i32, i32) {
    %c0_i32 = arith.constant 0 : i32
    %c0_i32_0 = arith.constant 0 : i32
    %c0_i32_1 = arith.constant 0 : i32
    return %c0_i32, %c0_i32_0 : i32, i32
  }
  func.func @transform_9(%arg0: i32) -> (i32, i32) {
    %c0_i32 = arith.constant 0 : i32
    %c0_i32_0 = arith.constant 0 : i32
    return %arg0, %c0_i32 : i32, i32
  }
}

</mosaic_0001>

<llo_original>
// kernel: tpu_custom_call.1
$region0: #{tpu_custom_call.1}
  #allocation0 [shape = 'u32[]', space=smem, size = 0x4, offset = 0x4, fixed_abs, tag = 'smem constant byte address 0x4 - core index']
  #allocation1 [shape = 'u32[144,128]{1,0:T(1,128)}', space=vmem, size = 0x12000, scoped, tag = 'internal scratch']
  %s0 = inlined_call_operand.hbm [shape: bf16[128,128], index: 0, kind: input, shape index: {}]
  %s1 = inlined_call_operand.hbm [shape: bf16[128,128], index: 1, kind: input, shape index: {}]
  %s2 = inlined_call_operand.vmem [shape: f32[1,128], index: 2, kind: input, shape index: {}]
  %s3 = inlined_call_operand.hbm [shape: bf16[128,128], index: 3, kind: input, shape index: {}]
  %s4 = inlined_call_operand.vmem [shape: f32[1,128], index: 4, kind: input, shape index: {}]
  %s5 = inlined_call_operand.hbm [shape: bf16[128,128], index: 5, kind: input, shape index: {}]
  %s6 = inlined_call_operand.vmem [shape: f32[1,128], index: 6, kind: input, shape index: {}]
  %s7 = inlined_call_operand.hbm [shape: bf16[128,128], index: 7, kind: input, shape index: {}]
  %s8 = inlined_call_operand.vmem [shape: f32[1,128], index: 8, kind: input, shape index: {}]
  %s9 = inlined_call_operand.hbm [shape: f32[128,128], index: 9, kind: output, shape index: {}]
  %s10 = sld [smem:[#allocation0]]
  $region66: #{tpu_custom_call.1} parent=0
    _
  %s12 = ssub.s32 1, %s10
  %s13 = scalar_select 0, %s12, %s10
  $region1: #{tpu_custom_call.1} parent=0
    #allocation2 [shape = 'u8[32768]{0}', space=vmem, size = 0x8000, scoped, tag = 'input window, operand 0, single buffered']
    #allocation3 [shape = 's32[1]{0}', space=sflag, size = 0x4, scoped, tag = 'scoped memory for tpu_custom_call.1']
    #allocation4 [shape = 's32[1]{0}', space=sflag, size = 0x4, scoped, tag = 'scoped memory for tpu_custom_call.1']
    #allocation5 [shape = 'u8[32768]{0}', space=vmem, size = 0x8000, scoped, tag = 'input window, operand 1, single buffered']
    #allocation6 [shape = 's32[1]{0}', space=sflag, size = 0x4, scoped, tag = 'scoped memory for tpu_custom_call.1']
    #allocation7 [shape = 'u8[32768]{0}', space=vmem, size = 0x8000, scoped, tag = 'input window, operand 3, single buffered']
    #allocation8 [shape = 'u8[32768]{0}', space=vmem, size = 0x8000, scoped, tag = 'input window, operand 5, single buffered']
    #allocation9 [shape = 's32[1]{0}', space=sflag, size = 0x4, scoped, tag = 'scoped memory for tpu_custom_call.1']
    #allocation10 [shape = 'u8[32768]{0}', space=vmem, size = 0x8000, scoped, tag = 'input window, operand 7, single buffered']
    #allocation11 [shape = 'u8[65536]{0}', space=vmem, size = 0x10000, scoped, tag = 'output window, operand 0, single buffered']
    %14 = vsyncpa [#allocation3], 0
    %15 = vsyncpa [#allocation6], 0
    %16 = vsyncpa [#allocation9], 0
    %17 = vsyncpa [#allocation4], 0
    // Predicated region
    $region2: #{tpu_custom_call.1} parent=1 // pred_check
      _
    $region3: #{tpu_custom_call.1} parent=1 // pred_check_branch
      %19 = sbr.rel (0) target = $region5
    $region4: #{tpu_custom_call.1} parent=1 // pred_region
      %s21 = ssub.s32 1024, 1024
      %22 = vsyncadd [#allocation3], %s21
      %s23 = sshll.u32 [#allocation2], 4
      %s24 = int_to_ptr.vmem [resolvable:$true] %s23
      %29 = dma.hbm_to_vmem [thread:$0]  %s0, 1024, %s24, [#allocation3], 64, 64, 4
    $region5: #{tpu_custom_call.1} parent=1 // pred_fallthru
      _
    // Predicated region
    $region6: #{tpu_custom_call.1} parent=1 // pred_check
      _
    $region7: #{tpu_custom_call.1} parent=1 // pred_check_branch
      %31 = sbr.rel (0) target = $region9
    $region8: #{tpu_custom_call.1} parent=1 // pred_region
      %s33 = ssub.s32 1024, 1024
      %34 = vsyncadd [#allocation6], %s33
      %s35 = sshll.u32 [#allocation5], 4
      %s36 = int_to_ptr.vmem [resolvable:$true] %s35
      %41 = dma.hbm_to_vmem [thread:$0]  %s1, 1024, %s36, [#allocation6], 64, 64, 4
    $region9: #{tpu_custom_call.1} parent=1 // pred_fallthru
      _
    // Predicated region
    $region10: #{tpu_custom_call.1} parent=1 // pred_check
      _
    $region11: #{tpu_custom_call.1} parent=1 // pred_check_branch
      %43 = sbr.rel (0) target = $region13
    $region12: #{tpu_custom_call.1} parent=1 // pred_region
      _
    $region13: #{tpu_custom_call.1} parent=1 // pred_fallthru
      _
    // Predicated region
    $region14: #{tpu_custom_call.1} parent=1 // pred_check
      _
    $region15: #{tpu_custom_call.1} parent=1 // pred_check_branch
      %45 = sbr.rel (0) target = $region17
    $region16: #{tpu_custom_call.1} parent=1 // pred_region
      %s47 = ssub.s32 1024, 1024
      %48 = vsyncadd [#allocation6], %s47
      %s49 = sshll.u32 [#allocation7], 4
      %s50 = int_to_ptr.vmem [resolvable:$true] %s49
      %55 = dma.hbm_to_vmem [thread:$0]  %s3, 1024, %s50, [#allocation6], 64, 64, 4
    $region17: #{tpu_custom_call.1} parent=1 // pred_fallthru
      _
    // Predicated region
    $region18: #{tpu_custom_call.1} parent=1 // pred_check
      _
    $region19: #{tpu_custom_call.1} parent=1 // pred_check_branch
      %57 = sbr.rel (0) target = $region21
    $region20: #{tpu_custom_call.1} parent=1 // pred_region
      _
    $region21: #{tpu_custom_call.1} parent=1 // pred_fallthru
      _
    // Predicated region
    $region22: #{tpu_custom_call.1} parent=1 // pred_check
      _
    $region23: #{tpu_custom_call.1} parent=1 // pred_check_branch
      %59 = sbr.rel (0) target = $region25
    $region24: #{tpu_custom_call.1} parent=1 // pred_region
      %s61 = ssub.s32 1024, 1024
      %62 = vsyncadd [#allocation9], %s61
      %s63 = sshll.u32 [#allocation8], 4
      %s64 = int_to_ptr.vmem [resolvable:$true] %s63
      %69 = dma.hbm_to_vmem [thread:$0]  %s5, 1024, %s64, [#allocation9], 64, 64, 4
    $region25: #{tpu_custom_call.1} parent=1 // pred_fallthru
      _
    // Predicated region
    $region26: #{tpu_custom_call.1} parent=1 // pred_check
      _
    $region27: #{tpu_custom_call.1} parent=1 // pred_check_branch
      %71 = sbr.rel (0) target = $region29
    $region28: #{tpu_custom_call.1} parent=1 // pred_region
      _
    $region29: #{tpu_custom_call.1} parent=1 // pred_fallthru
      _
    // Predicated region
    $region30: #{tpu_custom_call.1} parent=1 // pred_check
      _
    $region31: #{tpu_custom_call.1} parent=1 // pred_check_branch
      %73 = sbr.rel (0) target = $region33
    $region32: #{tpu_custom_call.1} parent=1 // pred_region
      %s75 = ssub.s32 1024, 1024
      %76 = vsyncadd [#allocation9], %s75
      %s77 = sshll.u32 [#allocation10], 4
      %s78 = int_to_ptr.vmem [resolvable:$true] %s77
      %83 = dma.hbm_to_vmem [thread:$0]  %s7, 1024, %s78, [#allocation9], 64, 64, 4
    $region33: #{tpu_custom_call.1} parent=1 // pred_fallthru
      _
    // Predicated region
    $region34: #{tpu_custom_call.1} parent=1 // pred_check
      _
    $region35: #{tpu_custom_call.1} parent=1 // pred_check_branch
      %85 = sbr.rel (0) target = $region37
    $region36: #{tpu_custom_call.1} parent=1 // pred_region
      _
    $region37: #{tpu_custom_call.1} parent=1 // pred_fallthru
      _
    // Predicated region
    $region38: #{tpu_custom_call.1} parent=1 // pred_check
      _
    $region39: #{tpu_custom_call.1} parent=1 // pred_check_branch
      %87 = sbr.rel (0) target = $region41
    $region40: #{tpu_custom_call.1} parent=1 // pred_region
      %88 = dma.done [#allocation3], 1024
    $region41: #{tpu_custom_call.1} parent=1 // pred_fallthru
      _
    // Predicated region
    $region42: #{tpu_custom_call.1} parent=1 // pred_check
      _
    $region43: #{tpu_custom_call.1} parent=1 // pred_check_branch
      %90 = sbr.rel (0) target = $region45
    $region44: #{tpu_custom_call.1} parent=1 // pred_region
      %91 = dma.done [#allocation6], 1024
    $region45: #{tpu_custom_call.1} parent=1 // pred_fallthru
      _
    // Predicated region
    $region46: #{tpu_custom_call.1} parent=1 // pred_check
      _
    $region47: #{tpu_custom_call.1} parent=1 // pred_check_branch
      %93 = sbr.rel (0) target = $region49
    $region48: #{tpu_custom_call.1} parent=1 // pred_region
      %94 = dma.done [#allocation6], 1024
    $region49: #{tpu_custom_call.1} parent=1 // pred_fallthru
      _
    // Predicated region
    $region50: #{tpu_custom_call.1} parent=1 // pred_check
      _
    $region51: #{tpu_custom_call.1} parent=1 // pred_check_branch
      %96 = sbr.rel (0) target = $region53
    $region52: #{tpu_custom_call.1} parent=1 // pred_region
      %97 = dma.done [#allocation9], 1024
    $region53: #{tpu_custom_call.1} parent=1 // pred_fallthru
      _
    // Predicated region
    $region54: #{tpu_custom_call.1} parent=1 // pred_check
      _
    $region55: #{tpu_custom_call.1} parent=1 // pred_check_branch
      %99 = sbr.rel (0) target = $region57
    $region56: #{tpu_custom_call.1} parent=1 // pred_region
      %100 = dma.done [#allocation9], 1024
    $region57: #{tpu_custom_call.1} parent=1 // pred_fallthru
      _
    %v102 = vld [vmem:[#allocation2] sm:$0xf]
    %v103 = vld [vmem:[#allocation2 + $0x4] sm:$0xf]
    %v104 = vld [vmem:[#allocation2 + $0x8] sm:$0xf]
    %v105 = vld [vmem:[#allocation2 + $0xc] sm:$0xf]
    %v106 = vld [vmem:[#allocation2 + $0x10] sm:$0xf]
    %v107 = vld [vmem:[#allocation2 + $0x14] sm:$0xf]
    %v108 = vld [vmem:[#allocation2 + $0x18] sm:$0xf]
    %v109 = vld [vmem:[#allocation2 + $0x1c] sm:$0xf]
    %v110 = vld [vmem:[#allocation2 + $0x20] sm:$0xf]
    %v111 = vld [vmem:[#allocation2 + $0x24] sm:$0xf]
    %v112 = vld [vmem:[#allocation2 + $0x28] sm:$0xf]
    %v113 = vld [vmem:[#allocation2 + $0x2c] sm:$0xf]
    %v114 = vld [vmem:[#allocation2 + $0x30] sm:$0xf]
    %v115 = vld [vmem:[#allocation2 + $0x34] sm:$0xf]
    %v116 = vld [vmem:[#allocation2 + $0x38] sm:$0xf]
    %v117 = vld [vmem:[#allocation2 + $0x3c] sm:$0xf]
    %v118 = vld [vmem:[#allocation5] sm:$0xf]
    %v119 = vld [vmem:[#allocation5 + $0x4] sm:$0xf]
    %v120 = vld [vmem:[#allocation5 + $0x8] sm:$0xf]
    %v121 = vld [vmem:[#allocation5 + $0xc] sm:$0xf]
    %v122 = vld [vmem:[#allocation5 + $0x10] sm:$0xf]
    %v123 = vld [vmem:[#allocation5 + $0x14] sm:$0xf]
    %v124 = vld [vmem:[#allocation5 + $0x18] sm:$0xf]
    %v125 = vld [vmem:[#allocation5 + $0x1c] sm:$0xf]
    %v126 = vld [vmem:[#allocation5 + $0x20] sm:$0xf]
    %v127 = vld [vmem:[#allocation5 + $0x24] sm:$0xf]
    %v128 = vld [vmem:[#allocation5 + $0x28] sm:$0xf]
    %v129 = vld [vmem:[#allocation5 + $0x2c] sm:$0xf]
    %v130 = vld [vmem:[#allocation5 + $0x30] sm:$0xf]
    %v131 = vld [vmem:[#allocation5 + $0x34] sm:$0xf]
    %v132 = vld [vmem:[#allocation5 + $0x38] sm:$0xf]
    %v133 = vld [vmem:[#allocation5 + $0x3c] sm:$0xf]
    %v134 = vld [vmem:[%s2] sm:$0x1]
    %v136 = vlaneseq
    %v137 = vshrl.u32 %v136, 7
    %v138 = vsub.s32 0, %v137
    %v139 = vrot.slane %v134, %v138
    %v157 = vunpack.c.l.b16 %v102
    %v158 = vunpack.c.l.b16 %v103
    %v159 = vunpack.c.l.b16 %v104
    %v160 = vunpack.c.l.b16 %v105
    %v161 = vunpack.c.l.b16 %v106
    %v162 = vunpack.c.l.b16 %v107
    %v163 = vunpack.c.l.b16 %v108
    %v164 = vunpack.c.l.b16 %v109
    %v165 = vunpack.c.l.b16 %v110
    %v166 = vunpack.c.l.b16 %v111
    %v167 = vunpack.c.l.b16 %v112
    %v168 = vunpack.c.l.b16 %v113
    %v169 = vunpack.c.l.b16 %v114
    %v170 = vunpack.c.l.b16 %v115
    %v171 = vunpack.c.l.b16 %v116
    %v172 = vunpack.c.l.b16 %v117
    %v173 = vpack.c.b16 %v158, %v157
    %v174 = vpack.c.b16 %v160, %v159
    %v175 = vpack.c.b16 %v162, %v161
    %v176 = vpack.c.b16 %v164, %v163
    %v177 = vpack.c.b16 %v166, %v165
    %v178 = vpack.c.b16 %v168, %v167
    %v179 = vpack.c.b16 %v170, %v169
    %v180 = vpack.c.b16 %v172, %v171
    %v205 = vunpack.c.l.b16 %v118
    %v206 = vunpack.c.l.b16 %v119
    %v207 = vunpack.c.l.b16 %v120
    %v208 = vunpack.c.l.b16 %v121
    %v209 = vunpack.c.l.b16 %v122
    %v210 = vunpack.c.l.b16 %v123
    %v211 = vunpack.c.l.b16 %v124
    %v212 = vunpack.c.l.b16 %v125
    %v213 = vunpack.c.l.b16 %v126
    %v214 = vunpack.c.l.b16 %v127
    %v215 = vunpack.c.l.b16 %v128
    %v216 = vunpack.c.l.b16 %v129
    %v217 = vunpack.c.l.b16 %v130
    %v218 = vunpack.c.l.b16 %v131
    %v219 = vunpack.c.l.b16 %v132
    %v220 = vunpack.c.l.b16 %v133
    %v221 = vpack.c.b16 %v206, %v205
    %v222 = vpack.c.b16 %v208, %v207
    %v223 = vpack.c.b16 %v210, %v209
    %v224 = vpack.c.b16 %v212, %v211
    %v225 = vpack.c.b16 %v214, %v213
    %v226 = vpack.c.b16 %v216, %v215
    %v227 = vpack.c.b16 %v218, %v217
    %v228 = vpack.c.b16 %v220, %v219
    %237 = vmatprep.subr.bf16.mxu0 0
    %238 = vmatpush1.bf16.msra.mxu0 %v228
    %239 = vmatprep.subr.bf16.mxu0 0
    %240 = vmatpush1.bf16.msra.mxu0 %v227
    %241 = vmatprep.subr.bf16.mxu0 0
    %242 = vmatpush1.bf16.msra.mxu0 %v226
    %243 = vmatprep.subr.bf16.mxu0 0
    %244 = vmatpush1.bf16.msra.mxu0 %v225
    %245 = vmatprep.subr.bf16.mxu0 0
    %246 = vmatpush1.bf16.msra.mxu0 %v224
    %247 = vmatprep.subr.bf16.mxu0 0
    %248 = vmatpush1.bf16.msra.mxu0 %v223
    %249 = vmatprep.subr.bf16.mxu0 0
    %250 = vmatpush1.bf16.msra.mxu0 %v222
    %251 = vmatprep.subr.bf16.mxu0 0
    %252 = vmatpush1.bf16.msra.mxu0 %v221
    %253 = vmatprep.subr.bf16.mxu0 0
    %254 = vmatpush2.bf16.msra.mxu0 0
    %255 = vmatprep.subr.bf16.mxu0 0
    %256 = vmatpush2.bf16.msra.mxu0 0
    %257 = vmatprep.subr.bf16.mxu0 0
    %258 = vmatpush2.bf16.msra.mxu0 0
    %259 = vmatprep.subr.bf16.mxu0 0
    %260 = vmatpush2.bf16.msra.mxu0 0
    %261 = vmatprep.subr.bf16.mxu0 0
    %262 = vmatpush2.bf16.msra.mxu0 0
    %263 = vmatprep.subr.bf16.mxu0 0
    %264 = vmatpush2.bf16.msra.mxu0 0
    %265 = vmatprep.subr.bf16.mxu0 0
    %266 = vmatpush2.bf16.msra.mxu0 0
    %267 = vmatprep.subr.bf16.mxu0 0
    %268 = vmatpush2.bf16.msra.mxu0 0
    %269 = vmatprep.mubr.bf16.mxu0 0
    %270 = vmatmul.mubr.bf16.gmra.mxu0 %v173
    %v271 = vpop.f32.mrf.mxu0
    %v272 = vadd.f32 %v139, %v271
    %v273 = vpop.f32.mrf.mxu0
    %v274 = vpop.f32.mrf.mxu0
    %v275 = vadd.f32 %v139, %v274
    %v276 = vpop.f32.mrf.mxu0
    %277 = vmatprep.mubr.bf16.mxu0 0
    %278 = vmatmul.mubr.bf16.gmra.mxu0 %v174
    %v279 = vpop.f32.mrf.mxu0
    %v280 = vadd.f32 %v139, %v279
    %v281 = vpop.f32.mrf.mxu0
    %v282 = vpop.f32.mrf.mxu0
    %v283 = vadd.f32 %v139, %v282
    %v284 = vpop.f32.mrf.mxu0
    %285 = vmatprep.mubr.bf16.mxu0 0
    %286 = vmatmul.mubr.bf16.gmra.mxu0 %v175
    %v287 = vpop.f32.mrf.mxu0
    %v288 = vadd.f32 %v139, %v287
    %v289 = vpop.f32.mrf.mxu0
    %v290 = vpop.f32.mrf.mxu0
    %v291 = vadd.f32 %v139, %v290
    %v292 = vpop.f32.mrf.mxu0
    %293 = vmatprep.mubr.bf16.mxu0 0
    %294 = vmatmul.mubr.bf16.gmra.mxu0 %v176
    %v295 = vpop.f32.mrf.mxu0
    %v296 = vadd.f32 %v139, %v295
    %v297 = vpop.f32.mrf.mxu0
    %v298 = vpop.f32.mrf.mxu0
    %v299 = vadd.f32 %v139, %v298
    %v300 = vpop.f32.mrf.mxu0
    %301 = vmatprep.mubr.bf16.mxu0 0
    %302 = vmatmul.mubr.bf16.gmra.mxu0 %v177
    %v303 = vpop.f32.mrf.mxu0
    %v304 = vadd.f32 %v139, %v303
    %v305 = vpop.f32.mrf.mxu0
    %v306 = vpop.f32.mrf.mxu0
    %v307 = vadd.f32 %v139, %v306
    %v308 = vpop.f32.mrf.mxu0
    %309 = vmatprep.mubr.bf16.mxu0 0
    %310 = vmatmul.mubr.bf16.gmra.mxu0 %v178
    %v311 = vpop.f32.mrf.mxu0
    %v312 = vadd.f32 %v139, %v311
    %v313 = vpop.f32.mrf.mxu0
    %v314 = vpop.f32.mrf.mxu0
    %v315 = vadd.f32 %v139, %v314
    %v316 = vpop.f32.mrf.mxu0
    %317 = vmatprep.mubr.bf16.mxu0 0
    %318 = vmatmul.mubr.bf16.gmra.mxu0 %v179
    %v319 = vpop.f32.mrf.mxu0
    %v320 = vadd.f32 %v139, %v319
    %v321 = vpop.f32.mrf.mxu0
    %v322 = vpop.f32.mrf.mxu0
    %v323 = vadd.f32 %v139, %v322
    %v324 = vpop.f32.mrf.mxu0
    %325 = vmatprep.mubr.bf16.mxu0 0
    %326 = vmatmul.mubr.bf16.gmra.mxu0 %v180
    %v327 = vpop.f32.mrf.mxu0
    %v328 = vadd.f32 %v139, %v327
    %v329 = vpop.f32.mrf.mxu0
    %v330 = vpop.f32.mrf.mxu0
    %v331 = vadd.f32 %v139, %v330
    %v332 = vpop.f32.mrf.mxu0
    %333 = vdwg.mxu0
    %v334 = vmax.f32 %v272, 0.0
    %v335 = vmax.f32 %v275, 0.0
    %v336 = vmax.f32 %v280, 0.0
    %v337 = vmax.f32 %v283, 0.0
    %v338 = vmax.f32 %v288, 0.0
    %v339 = vmax.f32 %v291, 0.0
    %v340 = vmax.f32 %v296, 0.0
    %v341 = vmax.f32 %v299, 0.0
    %v342 = vmax.f32 %v304, 0.0
    %v343 = vmax.f32 %v307, 0.0
    %v344 = vmax.f32 %v312, 0.0
    %v345 = vmax.f32 %v315, 0.0
    %v346 = vmax.f32 %v320, 0.0
    %v347 = vmax.f32 %v323, 0.0
    %v348 = vmax.f32 %v328, 0.0
    %v349 = vmax.f32 %v331, 0.0
    %v350 = vpack.c.bf16 %v335, %v334
    %v351 = vpack.c.bf16 %v337, %v336
    %v352 = vpack.c.bf16 %v339, %v338
    %v353 = vpack.c.bf16 %v341, %v340
    %v354 = vpack.c.bf16 %v343, %v342
    %v355 = vpack.c.bf16 %v345, %v344
    %v356 = vpack.c.bf16 %v347, %v346
    %v357 = vpack.c.bf16 %v349, %v348
    %v358 = vld [vmem:[#allocation7] sm:$0xf]
    %v359 = vld [vmem:[#allocation7 + $0x4] sm:$0xf]
    %v360 = vld [vmem:[#allocation7 + $0x8] sm:$0xf]
    %v361 = vld [vmem:[#allocation7 + $0xc] sm:$0xf]
    %v362 = vld [vmem:[#allocation7 + $0x10] sm:$0xf]
    %v363 = vld [vmem:[#allocation7 + $0x14] sm:$0xf]
    %v364 = vld [vmem:[#allocation7 + $0x18] sm:$0xf]
    %v365 = vld [vmem:[#allocation7 + $0x1c] sm:$0xf]
    %v366 = vld [vmem:[#allocation7 + $0x20] sm:$0xf]
    %v367 = vld [vmem:[#allocation7 + $0x24] sm:$0xf]
    %v368 = vld [vmem:[#allocation7 + $0x28] sm:$0xf]
    %v369 = vld [vmem:[#allocation7 + $0x2c] sm:$0xf]
    %v370 = vld [vmem:[#allocation7 + $0x30] sm:$0xf]
    %v371 = vld [vmem:[#allocation7 + $0x34] sm:$0xf]
    %v372 = vld [vmem:[#allocation7 + $0x38] sm:$0xf]
    %v373 = vld [vmem:[#allocation7 + $0x3c] sm:$0xf]
    %v374 = vld [vmem:[%s4] sm:$0x1]
    %v376 = vlaneseq
    %v377 = vshrl.u32 %v376, 7
    %v378 = vsub.s32 0, %v377
    %v379 = vrot.slane %v374, %v378
    %v397 = vunpack.c.l.b16 %v358
    %v398 = vunpack.c.l.b16 %v359
    %v399 = vunpack.c.l.b16 %v360
    %v400 = vunpack.c.l.b16 %v361
    %v401 = vunpack.c.l.b16 %v362
    %v402 = vunpack.c.l.b16 %v363
    %v403 = vunpack.c.l.b16 %v364
    %v404 = vunpack.c.l.b16 %v365
    %v405 = vunpack.c.l.b16 %v366
    %v406 = vunpack.c.l.b16 %v367
    %v407 = vunpack.c.l.b16 %v368
    %v408 = vunpack.c.l.b16 %v369
    %v409 = vunpack.c.l.b16 %v370
    %v410 = vunpack.c.l.b16 %v371
    %v411 = vunpack.c.l.b16 %v372
    %v412 = vunpack.c.l.b16 %v373
    %v413 = vpack.c.b16 %v398, %v397
    %v414 = vpack.c.b16 %v400, %v399
    %v415 = vpack.c.b16 %v402, %v401
    %v416 = vpack.c.b16 %v404, %v403
    %v417 = vpack.c.b16 %v406, %v405
    %v418 = vpack.c.b16 %v408, %v407
    %v419 = vpack.c.b16 %v410, %v409
    %v420 = vpack.c.b16 %v412, %v411
    %429 = vmatprep.subr.bf16.mxu0 0
    %430 = vmatpush1.bf16.msra.mxu0 %v420
    %431 = vmatprep.subr.bf16.mxu0 0
    %432 = vmatpush1.bf16.msra.mxu0 %v419
    %433 = vmatprep.subr.bf16.mxu0 0
    %434 = vmatpush1.bf16.msra.mxu0 %v418
    %435 = vmatprep.subr.bf16.mxu0 0
    %436 = vmatpush1.bf16.msra.mxu0 %v417
    %437 = vmatprep.subr.bf16.mxu0 0
    %438 = vmatpush1.bf16.msra.mxu0 %v416
    %439 = vmatprep.subr.bf16.mxu0 0
    %440 = vmatpush1.bf16.msra.mxu0 %v415
    %441 = vmatprep.subr.bf16.mxu0 0
    %442 = vmatpush1.bf16.msra.mxu0 %v414
    %443 = vmatprep.subr.bf16.mxu0 0
    %444 = vmatpush1.bf16.msra.mxu0 %v413
    %445 = vmatprep.subr.bf16.mxu0 0
    %446 = vmatpush2.bf16.msra.mxu0 0
    %447 = vmatprep.subr.bf16.mxu0 0
    %448 = vmatpush2.bf16.msra.mxu0 0
    %449 = vmatprep.subr.bf16.mxu0 0
    %450 = vmatpush2.bf16.msra.mxu0 0
    %451 = vmatprep.subr.bf16.mxu0 0
    %452 = vmatpush2.bf16.msra.mxu0 0
    %453 = vmatprep.subr.bf16.mxu0 0
    %454 = vmatpush2.bf16.msra.mxu0 0
    %455 = vmatprep.subr.bf16.mxu0 0
    %456 = vmatpush2.bf16.msra.mxu0 0
    %457 = vmatprep.subr.bf16.mxu0 0
    %458 = vmatpush2.bf16.msra.mxu0 0
    %459 = vmatprep.subr.bf16.mxu0 0
    %460 = vmatpush2.bf16.msra.mxu0 0
    %461 = vmatprep.mubr.bf16.mxu0 0
    %462 = vmatmul.mubr.bf16.gmra.mxu0 %v350
    %v463 = vpop.f32.mrf.mxu0
    %v464 = vadd.f32 %v379, %v463
    %v465 = vpop.f32.mrf.mxu0
    %v466 = vpop.f32.mrf.mxu0
    %v467 = vadd.f32 %v379, %v466
    %v468 = vpop.f32.mrf.mxu0
    %469 = vmatprep.mubr.bf16.mxu0 0
    %470 = vmatmul.mubr.bf16.gmra.mxu0 %v351
    %v471 = vpop.f32.mrf.mxu0
    %v472 = vadd.f32 %v379, %v471
    %v473 = vpop.f32.mrf.mxu0
    %v474 = vpop.f32.mrf.mxu0
    %v475 = vadd.f32 %v379, %v474
    %v476 = vpop.f32.mrf.mxu0
    %477 = vmatprep.mubr.bf16.mxu0 0
    %478 = vmatmul.mubr.bf16.gmra.mxu0 %v352
    %v479 = vpop.f32.mrf.mxu0
    %v480 = vadd.f32 %v379, %v479
    %v481 = vpop.f32.mrf.mxu0
    %v482 = vpop.f32.mrf.mxu0
    %v483 = vadd.f32 %v379, %v482
    %v484 = vpop.f32.mrf.mxu0
    %485 = vmatprep.mubr.bf16.mxu0 0
    %486 = vmatmul.mubr.bf16.gmra.mxu0 %v353
    %v487 = vpop.f32.mrf.mxu0
    %v488 = vadd.f32 %v379, %v487
    %v489 = vpop.f32.mrf.mxu0
    %v490 = vpop.f32.mrf.mxu0
    %v491 = vadd.f32 %v379, %v490
    %v492 = vpop.f32.mrf.mxu0
    %493 = vmatprep.mubr.bf16.mxu0 0
    %494 = vmatmul.mubr.bf16.gmra.mxu0 %v354
    %v495 = vpop.f32.mrf.mxu0
    %v496 = vadd.f32 %v379, %v495
    %v497 = vpop.f32.mrf.mxu0
    %v498 = vpop.f32.mrf.mxu0
    %v499 = vadd.f32 %v379, %v498
    %v500 = vpop.f32.mrf.mxu0
    %501 = vmatprep.mubr.bf16.mxu0 0
    %502 = vmatmul.mubr.bf16.gmra.mxu0 %v355
    %v503 = vpop.f32.mrf.mxu0
    %v504 = vadd.f32 %v379, %v503
    %v505 = vpop.f32.mrf.mxu0
    %v506 = vpop.f32.mrf.mxu0
    %v507 = vadd.f32 %v379, %v506
    %v508 = vpop.f32.mrf.mxu0
    %509 = vmatprep.mubr.bf16.mxu0 0
    %510 = vmatmul.mubr.bf16.gmra.mxu0 %v356
    %v511 = vpop.f32.mrf.mxu0
    %v512 = vadd.f32 %v379, %v511
    %v513 = vpop.f32.mrf.mxu0
    %v514 = vpop.f32.mrf.mxu0
    %v515 = vadd.f32 %v379, %v514
    %v516 = vpop.f32.mrf.mxu0
    %517 = vmatprep.mubr.bf16.mxu0 0
    %518 = vmatmul.mubr.bf16.gmra.mxu0 %v357
    %v519 = vpop.f32.mrf.mxu0
    %v520 = vadd.f32 %v379, %v519
    %v521 = vpop.f32.mrf.mxu0
    %v522 = vpop.f32.mrf.mxu0
    %v523 = vadd.f32 %v379, %v522
    %v524 = vpop.f32.mrf.mxu0
    %525 = vdwg.mxu0
    %v526 = vmax.f32 %v464, 0.0
    %v527 = vmax.f32 %v467, 0.0
    %v528 = vmax.f32 %v472, 0.0
    %v529 = vmax.f32 %v475, 0.0
    %v530 = vmax.f32 %v480, 0.0
    %v531 = vmax.f32 %v483, 0.0
    %v532 = vmax.f32 %v488, 0.0
    %v533 = vmax.f32 %v491, 0.0
    %v534 = vmax.f32 %v496, 0.0
    %v535 = vmax.f32 %v499, 0.0
    %v536 = vmax.f32 %v504, 0.0
    %v537 = vmax.f32 %v507, 0.0
    %v538 = vmax.f32 %v512, 0.0
    %v539 = vmax.f32 %v515, 0.0
    %v540 = vmax.f32 %v520, 0.0
    %v541 = vmax.f32 %v523, 0.0
    %v542 = vpack.c.bf16 %v527, %v526
    %v543 = vpack.c.bf16 %v529, %v528
    %v544 = vpack.c.bf16 %v531, %v530
    %v545 = vpack.c.bf16 %v533, %v532
    %v546 = vpack.c.bf16 %v535, %v534
    %v547 = vpack.c.bf16 %v537, %v536
    %v548 = vpack.c.bf16 %v539, %v538
    %v549 = vpack.c.bf16 %v541, %v540
    %v550 = vld [vmem:[#allocation8] sm:$0xf]
    %v551 = vld [vmem:[#allocation8 + $0x4] sm:$0xf]
    %v552 = vld [vmem:[#allocation8 + $0x8] sm:$0xf]
    %v553 = vld [vmem:[#allocation8 + $0xc] sm:$0xf]
    %v554 = vld [vmem:[#allocation8 + $0x10] sm:$0xf]
    %v555 = vld [vmem:[#allocation8 + $0x14] sm:$0xf]
    %v556 = vld [vmem:[#allocation8 + $0x18] sm:$0xf]
    %v557 = vld [vmem:[#allocation8 + $0x1c] sm:$0xf]
    %v558 = vld [vmem:[#allocation8 + $0x20] sm:$0xf]
    %v559 = vld [vmem:[#allocation8 + $0x24] sm:$0xf]
    %v560 = vld [vmem:[#allocation8 + $0x28] sm:$0xf]
    %v561 = vld [vmem:[#allocation8 + $0x2c] sm:$0xf]
    %v562 = vld [vmem:[#allocation8 + $0x30] sm:$0xf]
    %v563 = vld [vmem:[#allocation8 + $0x34] sm:$0xf]
    %v564 = vld [vmem:[#allocation8 + $0x38] sm:$0xf]
    %v565 = vld [vmem:[#allocation8 + $0x3c] sm:$0xf]
    %v566 = vld [vmem:[%s6] sm:$0x1]
    %v568 = vlaneseq
    %v569 = vshrl.u32 %v568, 7
    %v570 = vsub.s32 0, %v569
    %v571 = vrot.slane %v566, %v570
    %v589 = vunpack.c.l.b16 %v550
    %v590 = vunpack.c.l.b16 %v551
    %v591 = vunpack.c.l.b16 %v552
    %v592 = vunpack.c.l.b16 %v553
    %v593 = vunpack.c.l.b16 %v554
    %v594 = vunpack.c.l.b16 %v555
    %v595 = vunpack.c.l.b16 %v556
    %v596 = vunpack.c.l.b16 %v557
    %v597 = vunpack.c.l.b16 %v558
    %v598 = vunpack.c.l.b16 %v559
    %v599 = vunpack.c.l.b16 %v560
    %v600 = vunpack.c.l.b16 %v561
    %v601 = vunpack.c.l.b16 %v562
    %v602 = vunpack.c.l.b16 %v563
    %v603 = vunpack.c.l.b16 %v564
    %v604 = vunpack.c.l.b16 %v565
    %v605 = vpack.c.b16 %v590, %v589
    %v606 = vpack.c.b16 %v592, %v591
    %v607 = vpack.c.b16 %v594, %v593
    %v608 = vpack.c.b16 %v596, %v595
    %v609 = vpack.c.b16 %v598, %v597
    %v610 = vpack.c.b16 %v600, %v599
    %v611 = vpack.c.b16 %v602, %v601
    %v612 = vpack.c.b16 %v604, %v603
    %621 = vmatprep.subr.bf16.mxu0 0
    %622 = vmatpush1.bf16.msra.mxu0 %v612
    %623 = vmatprep.subr.bf16.mxu0 0
    %624 = vmatpush1.bf16.msra.mxu0 %v611
    %625 = vmatprep.subr.bf16.mxu0 0
    %626 = vmatpush1.bf16.msra.mxu0 %v610
    %627 = vmatprep.subr.bf16.mxu0 0
    %628 = vmatpush1.bf16.msra.mxu0 %v609
    %629 = vmatprep.subr.bf16.mxu0 0
    %630 = vmatpush1.bf16.msra.mxu0 %v608
    %631 = vmatprep.subr.bf16.mxu0 0
    %632 = vmatpush1.bf16.msra.mxu0 %v607
    %633 = vmatprep.subr.bf16.mxu0 0
    %634 = vmatpush1.bf16.msra.mxu0 %v606
    %635 = vmatprep.subr.bf16.mxu0 0
    %636 = vmatpush1.bf16.msra.mxu0 %v605
    %637 = vmatprep.subr.bf16.mxu0 0
    %638 = vmatpush2.bf16.msra.mxu0 0
    %639 = vmatprep.subr.bf16.mxu0 0
    %640 = vmatpush2.bf16.msra.mxu0 0
    %641 = vmatprep.subr.bf16.mxu0 0
    %642 = vmatpush2.bf16.msra.mxu0 0
    %643 = vmatprep.subr.bf16.mxu0 0
    %644 = vmatpush2.bf16.msra.mxu0 0
    %645 = vmatprep.subr.bf16.mxu0 0
    %646 = vmatpush2.bf16.msra.mxu0 0
    %647 = vmatprep.subr.bf16.mxu0 0
    %648 = vmatpush2.bf16.msra.mxu0 0
    %649 = vmatprep.subr.bf16.mxu0 0
    %650 = vmatpush2.bf16.msra.mxu0 0
    %651 = vmatprep.subr.bf16.mxu0 0
    %652 = vmatpush2.bf16.msra.mxu0 0
    %653 = vmatprep.mubr.bf16.mxu0 0
    %654 = vmatmul.mubr.bf16.gmra.mxu0 %v542
    %v655 = vpop.f32.mrf.mxu0
    %v656 = vadd.f32 %v571, %v655
    %v657 = vpop.f32.mrf.mxu0
    %v658 = vpop.f32.mrf.mxu0
    %v659 = vadd.f32 %v571, %v658
    %v660 = vpop.f32.mrf.mxu0
    %661 = vmatprep.mubr.bf16.mxu0 0
    %662 = vmatmul.mubr.bf16.gmra.mxu0 %v543
    %v663 = vpop.f32.mrf.mxu0
    %v664 = vadd.f32 %v571, %v663
    %v665 = vpop.f32.mrf.mxu0
    %v666 = vpop.f32.mrf.mxu0
    %v667 = vadd.f32 %v571, %v666
    %v668 = vpop.f32.mrf.mxu0
    %669 = vmatprep.mubr.bf16.mxu0 0
    %670 = vmatmul.mubr.bf16.gmra.mxu0 %v544
    %v671 = vpop.f32.mrf.mxu0
    %v672 = vadd.f32 %v571, %v671
    %v673 = vpop.f32.mrf.mxu0
    %v674 = vpop.f32.mrf.mxu0
    %v675 = vadd.f32 %v571, %v674
    %v676 = vpop.f32.mrf.mxu0
    %677 = vmatprep.mubr.bf16.mxu0 0
    %678 = vmatmul.mubr.bf16.gmra.mxu0 %v545
    %v679 = vpop.f32.mrf.mxu0
    %v680 = vadd.f32 %v571, %v679
    %v681 = vpop.f32.mrf.mxu0
    %v682 = vpop.f32.mrf.mxu0
    %v683 = vadd.f32 %v571, %v682
    %v684 = vpop.f32.mrf.mxu0
    %685 = vmatprep.mubr.bf16.mxu0 0
    %686 = vmatmul.mubr.bf16.gmra.mxu0 %v546
    %v687 = vpop.f32.mrf.mxu0
    %v688 = vadd.f32 %v571, %v687
    %v689 = vpop.f32.mrf.mxu0
    %v690 = vpop.f32.mrf.mxu0
    %v691 = vadd.f32 %v571, %v690
    %v692 = vpop.f32.mrf.mxu0
    %693 = vmatprep.mubr.bf16.mxu0 0
    %694 = vmatmul.mubr.bf16.gmra.mxu0 %v547
    %v695 = vpop.f32.mrf.mxu0
    %v696 = vadd.f32 %v571, %v695
    %v697 = vpop.f32.mrf.mxu0
    %v698 = vpop.f32.mrf.mxu0
    %v699 = vadd.f32 %v571, %v698
    %v700 = vpop.f32.mrf.mxu0
    %701 = vmatprep.mubr.bf16.mxu0 0
    %702 = vmatmul.mubr.bf16.gmra.mxu0 %v548
    %v703 = vpop.f32.mrf.mxu0
    %v704 = vadd.f32 %v571, %v703
    %v705 = vpop.f32.mrf.mxu0
    %v706 = vpop.f32.mrf.mxu0
    %v707 = vadd.f32 %v571, %v706
    %v708 = vpop.f32.mrf.mxu0
    %709 = vmatprep.mubr.bf16.mxu0 0
    %710 = vmatmul.mubr.bf16.gmra.mxu0 %v549
    %v711 = vpop.f32.mrf.mxu0
    %v712 = vadd.f32 %v571, %v711
    %v713 = vpop.f32.mrf.mxu0
    %v714 = vpop.f32.mrf.mxu0
    %v715 = vadd.f32 %v571, %v714
    %v716 = vpop.f32.mrf.mxu0
    %717 = vdwg.mxu0
    %v718 = vmax.f32 %v656, 0.0
    %v719 = vmax.f32 %v659, 0.0
    %v720 = vmax.f32 %v664, 0.0
    %v721 = vmax.f32 %v667, 0.0
    %v722 = vmax.f32 %v672, 0.0
    %v723 = vmax.f32 %v675, 0.0
    %v724 = vmax.f32 %v680, 0.0
    %v725 = vmax.f32 %v683, 0.0
    %v726 = vmax.f32 %v688, 0.0
    %v727 = vmax.f32 %v691, 0.0
    %v728 = vmax.f32 %v696, 0.0
    %v729 = vmax.f32 %v699, 0.0
    %v730 = vmax.f32 %v704, 0.0
    %v731 = vmax.f32 %v707, 0.0
    %v732 = vmax.f32 %v712, 0.0
    %v733 = vmax.f32 %v715, 0.0
    %v734 = vpack.c.bf16 %v719, %v718
    %v735 = vpack.c.bf16 %v721, %v720
    %v736 = vpack.c.bf16 %v723, %v722
    %v737 = vpack.c.bf16 %v725, %v724
    %v738 = vpack.c.bf16 %v727, %v726
    %v739 = vpack.c.bf16 %v729, %v728
    %v740 = vpack.c.bf16 %v731, %v730
    %v741 = vpack.c.bf16 %v733, %v732
    %v742 = vld [vmem:[#allocation10] sm:$0xf]
    %v743 = vld [vmem:[#allocation10 + $0x4] sm:$0xf]
    %v744 = vld [vmem:[#allocation10 + $0x8] sm:$0xf]
    %v745 = vld [vmem:[#allocation10 + $0xc] sm:$0xf]
    %v746 = vld [vmem:[#allocation10 + $0x10] sm:$0xf]
    %v747 = vld [vmem:[#allocation10 + $0x14] sm:$0xf]
    %v748 = vld [vmem:[#allocation10 + $0x18] sm:$0xf]
    %v749 = vld [vmem:[#allocation10 + $0x1c] sm:$0xf]
    %v750 = vld [vmem:[#allocation10 + $0x20] sm:$0xf]
    %v751 = vld [vmem:[#allocation10 + $0x24] sm:$0xf]
    %v752 = vld [vmem:[#allocation10 + $0x28] sm:$0xf]
    %v753 = vld [vmem:[#allocation10 + $0x2c] sm:$0xf]
    %v754 = vld [vmem:[#allocation10 + $0x30] sm:$0xf]
    %v755 = vld [vmem:[#allocation10 + $0x34] sm:$0xf]
    %v756 = vld [vmem:[#allocation10 + $0x38] sm:$0xf]
    %v757 = vld [vmem:[#allocation10 + $0x3c] sm:$0xf]
    %v758 = vld [vmem:[%s8] sm:$0x1]
    %v760 = vlaneseq
    %v761 = vshrl.u32 %v760, 7
    %v762 = vsub.s32 0, %v761
    %v763 = vrot.slane %v758, %v762
    %v781 = vunpack.c.l.b16 %v742
    %v782 = vunpack.c.l.b16 %v743
    %v783 = vunpack.c.l.b16 %v744
    %v784 = vunpack.c.l.b16 %v745
    %v785 = vunpack.c.l.b16 %v746
    %v786 = vunpack.c.l.b16 %v747
    %v787 = vunpack.c.l.b16 %v748
    %v788 = vunpack.c.l.b16 %v749
    %v789 = vunpack.c.l.b16 %v750
    %v790 = vunpack.c.l.b16 %v751
    %v791 = vunpack.c.l.b16 %v752
    %v792 = vunpack.c.l.b16 %v753
    %v793 = vunpack.c.l.b16 %v754
    %v794 = vunpack.c.l.b16 %v755
    %v795 = vunpack.c.l.b16 %v756
    %v796 = vunpack.c.l.b16 %v757
    %v797 = vpack.c.b16 %v782, %v781
    %v798 = vpack.c.b16 %v784, %v783
    %v799 = vpack.c.b16 %v786, %v785
    %v800 = vpack.c.b16 %v788, %v787
    %v801 = vpack.c.b16 %v790, %v789
    %v802 = vpack.c.b16 %v792, %v791
    %v803 = vpack.c.b16 %v794, %v793
    %v804 = vpack.c.b16 %v796, %v795
    %813 = vmatprep.subr.bf16.mxu0 0
    %814 = vmatpush1.bf16.msra.mxu0 %v804
    %815 = vmatprep.subr.bf16.mxu0 0
    %816 = vmatpush1.bf16.msra.mxu0 %v803
    %817 = vmatprep.subr.bf16.mxu0 0
    %818 = vmatpush1.bf16.msra.mxu0 %v802
    %819 = vmatprep.subr.bf16.mxu0 0
    %820 = vmatpush1.bf16.msra.mxu0 %v801
    %821 = vmatprep.subr.bf16.mxu0 0
    %822 = vmatpush1.bf16.msra.mxu0 %v800
    %823 = vmatprep.subr.bf16.mxu0 0
    %824 = vmatpush1.bf16.msra.mxu0 %v799
    %825 = vmatprep.subr.bf16.mxu0 0
    %826 = vmatpush1.bf16.msra.mxu0 %v798
    %827 = vmatprep.subr.bf16.mxu0 0
    %828 = vmatpush1.bf16.msra.mxu0 %v797
    %829 = vmatprep.subr.bf16.mxu0 0
    %830 = vmatpush2.bf16.msra.mxu0 0
    %831 = vmatprep.subr.bf16.mxu0 0
    %832 = vmatpush2.bf16.msra.mxu0 0
    %833 = vmatprep.subr.bf16.mxu0 0
    %834 = vmatpush2.bf16.msra.mxu0 0
    %835 = vmatprep.subr.bf16.mxu0 0
    %836 = vmatpush2.bf16.msra.mxu0 0
    %837 = vmatprep.subr.bf16.mxu0 0
    %838 = vmatpush2.bf16.msra.mxu0 0
    %839 = vmatprep.subr.bf16.mxu0 0
    %840 = vmatpush2.bf16.msra.mxu0 0
    %841 = vmatprep.subr.bf16.mxu0 0
    %842 = vmatpush2.bf16.msra.mxu0 0
    %843 = vmatprep.subr.bf16.mxu0 0
    %844 = vmatpush2.bf16.msra.mxu0 0
    %845 = vmatprep.mubr.bf16.mxu0 0
    %846 = vmatmul.mubr.bf16.gmra.mxu0 %v734
    %v847 = vpop.f32.mrf.mxu0
    %v848 = vadd.f32 %v763, %v847
    %v849 = vpop.f32.mrf.mxu0
    %v850 = vpop.f32.mrf.mxu0
    %v851 = vadd.f32 %v763, %v850
    %v852 = vpop.f32.mrf.mxu0
    %853 = vmatprep.mubr.bf16.mxu0 0
    %854 = vmatmul.mubr.bf16.gmra.mxu0 %v735
    %v855 = vpop.f32.mrf.mxu0
    %v856 = vadd.f32 %v763, %v855
    %v857 = vpop.f32.mrf.mxu0
    %v858 = vpop.f32.mrf.mxu0
    %v859 = vadd.f32 %v763, %v858
    %v860 = vpop.f32.mrf.mxu0
    %861 = vmatprep.mubr.bf16.mxu0 0
    %862 = vmatmul.mubr.bf16.gmra.mxu0 %v736
    %v863 = vpop.f32.mrf.mxu0
    %v864 = vadd.f32 %v763, %v863
    %v865 = vpop.f32.mrf.mxu0
    %v866 = vpop.f32.mrf.mxu0
    %v867 = vadd.f32 %v763, %v866
    %v868 = vpop.f32.mrf.mxu0
    %869 = vmatprep.mubr.bf16.mxu0 0
    %870 = vmatmul.mubr.bf16.gmra.mxu0 %v737
    %v871 = vpop.f32.mrf.mxu0
    %v872 = vadd.f32 %v763, %v871
    %v873 = vpop.f32.mrf.mxu0
    %v874 = vpop.f32.mrf.mxu0
    %v875 = vadd.f32 %v763, %v874
    %v876 = vpop.f32.mrf.mxu0
    %877 = vmatprep.mubr.bf16.mxu0 0
    %878 = vmatmul.mubr.bf16.gmra.mxu0 %v738
    %v879 = vpop.f32.mrf.mxu0
    %v880 = vadd.f32 %v763, %v879
    %v881 = vpop.f32.mrf.mxu0
    %v882 = vpop.f32.mrf.mxu0
    %v883 = vadd.f32 %v763, %v882
    %v884 = vpop.f32.mrf.mxu0
    %885 = vmatprep.mubr.bf16.mxu0 0
    %886 = vmatmul.mubr.bf16.gmra.mxu0 %v739
    %v887 = vpop.f32.mrf.mxu0
    %v888 = vadd.f32 %v763, %v887
    %v889 = vpop.f32.mrf.mxu0
    %v890 = vpop.f32.mrf.mxu0
    %v891 = vadd.f32 %v763, %v890
    %v892 = vpop.f32.mrf.mxu0
    %893 = vmatprep.mubr.bf16.mxu0 0
    %894 = vmatmul.mubr.bf16.gmra.mxu0 %v740
    %v895 = vpop.f32.mrf.mxu0
    %v896 = vadd.f32 %v763, %v895
    %v897 = vpop.f32.mrf.mxu0
    %v898 = vpop.f32.mrf.mxu0
    %v899 = vadd.f32 %v763, %v898
    %v900 = vpop.f32.mrf.mxu0
    %901 = vmatprep.mubr.bf16.mxu0 0
    %902 = vmatmul.mubr.bf16.gmra.mxu0 %v741
    %v903 = vpop.f32.mrf.mxu0
    %v904 = vadd.f32 %v763, %v903
    %v905 = vpop.f32.mrf.mxu0
    %v906 = vpop.f32.mrf.mxu0
    %v907 = vadd.f32 %v763, %v906
    %v908 = vpop.f32.mrf.mxu0
    %909 = vdwg.mxu0
    %910 = vst [vmem:[#allocation11] sm:$0xff] %v848
    %911 = vst [vmem:[#allocation11 + $0x8] sm:$0xff] %v851
    %912 = vst [vmem:[#allocation11 + $0x10] sm:$0xff] %v856
    %913 = vst [vmem:[#allocation11 + $0x18] sm:$0xff] %v859
    %914 = vst [vmem:[#allocation11 + $0x20] sm:$0xff] %v864
    %915 = vst [vmem:[#allocation11 + $0x28] sm:$0xff] %v867
    %916 = vst [vmem:[#allocation11 + $0x30] sm:$0xff] %v872
    %917 = vst [vmem:[#allocation11 + $0x38] sm:$0xff] %v875
    %918 = vst [vmem:[#allocation11 + $0x40] sm:$0xff] %v880
    %919 = vst [vmem:[#allocation11 + $0x48] sm:$0xff] %v883
    %920 = vst [vmem:[#allocation11 + $0x50] sm:$0xff] %v888
    %921 = vst [vmem:[#allocation11 + $0x58] sm:$0xff] %v891
    %922 = vst [vmem:[#allocation11 + $0x60] sm:$0xff] %v896
    %923 = vst [vmem:[#allocation11 + $0x68] sm:$0xff] %v899
    %924 = vst [vmem:[#allocation11 + $0x70] sm:$0xff] %v904
    %925 = vst [vmem:[#allocation11 + $0x78] sm:$0xff] %v907
    // Predicated region
    $region58: #{tpu_custom_call.1} parent=1 // pred_check
      _
    $region59: #{tpu_custom_call.1} parent=1 // pred_check_branch
      %927 = sbr.rel (0) target = $region61
    $region60: #{tpu_custom_call.1} parent=1 // pred_region
      %s929 = ssub.s32 2048, 2048
      %930 = vsyncadd [#allocation4], %s929
      %s931 = sshll.u32 [#allocation11], 4
      %s932 = int_to_ptr.vmem [resolvable:$true] %s931
      %937 = dma.vmem_to_hbm [thread:$0]  %s932, 2048, %s9, [#allocation4], 128, 128, 8
    $region61: #{tpu_custom_call.1} parent=1 // pred_fallthru
      _
    // Predicated region
    $region62: #{tpu_custom_call.1} parent=1 // pred_check
      _
    $region63: #{tpu_custom_call.1} parent=1 // pred_check_branch
      %939 = sbr.rel (0) target = $region65
    $region64: #{tpu_custom_call.1} parent=1 // pred_region
      %940 = dma.done [#allocation4], 2048
    $region65: #{tpu_custom_call.1} parent=1 // pred_fallthru
      _
    %941 = vsyncpa [#allocation3], 1
    %942 = vsyncpa [#allocation6], 1
    %943 = vsyncpa [#allocation9], 1
    %944 = vsyncpa [#allocation4], 1

</llo_original>
